<compile_context>
chip_gen: v6e
topology: v6e:2x2x1
jax: 0.10.0
libtpu: 0.0.40
codegen_flags: <defaults>
</compile_context>

<pallas_src>
import jax
import jax.numpy as jnp
from jax.experimental import pallas as pl
from jax.experimental.pallas import tpu as pltpu

_LANE = 128
_SUBLANE = 16            # bf16 sublane packing (also satisfies the f32 rule of 8)
_MAX_BLOCK_BATCH = 2048  # keeps f32 intermediates well inside the scoped-VMEM budget


def _round_up(n, m):
    return ((n + m - 1) // m) * m


# --------------------------------------------------------------------------- #
# Kernel: fused 3-layer MLP per batch tile
# --------------------------------------------------------------------------- #
def _mlp_kernel(x_ref, w1_ref, b1_ref, w2_ref, b2_ref, w3_ref, b3_ref, o_ref):
    # f32 x tile comes straight from HBM; cast to bf16 on the VPU here instead
    # of paying a separate wrapper-side HBM pass over x.
    x = x_ref[...].astype(jnp.bfloat16)
    h1 = jnp.dot(x, w1_ref[...], preferred_element_type=jnp.float32) + b1_ref[...]
    h1 = jnp.maximum(h1, 0.0).astype(jnp.bfloat16)
    h2 = jnp.dot(h1, w2_ref[...], preferred_element_type=jnp.float32) + b2_ref[...]
    h2 = jnp.maximum(h2, 0.0).astype(jnp.bfloat16)
    out = jnp.dot(h2, w3_ref[...], preferred_element_type=jnp.float32) + b3_ref[...]
    o_ref[...] = out.astype(o_ref.dtype)   # bf16, lane-dense (128-wide) store


# --------------------------------------------------------------------------- #
# Wrapper
# --------------------------------------------------------------------------- #
def classifier_forward(x, prep, *, block_batch=1024):
    """x: (B, x_dim) float32/bf16.  prep: output of prepare_classifier_params."""
    w1, b1 = prep["w1"], prep["b1"]
    w2, b2 = prep["w2"], prep["b2"]
    w3, b3 = prep["w3"], prep["b3"]
    y_dim = prep["y_dim"]

    B, x_dim = x.shape
    hid = w1.shape[1]        # padded hidden (384)
    y_pad = w3.shape[1]      # padded output (128)

    # ---- batch-tile selection ------------------------------------------- #
    bb_req = max(_SUBLANE, min(_round_up(block_batch, _SUBLANE), _MAX_BLOCK_BATCH))
    B_ceil = _round_up(B, _SUBLANE)
    n_steps = pl.cdiv(B_ceil, bb_req)
    if B_ceil >= 1024:
        # Big enough batch: keep >=2 steps so the input/output pipeline runs
        # and (v7x) both TensorCores get a share of the "parallel" grid axis.
        n_steps = max(n_steps, 2)
    bb = _round_up(pl.cdiv(B_ceil, n_steps), _SUBLANE)   # balanced tiles, min padding
    B_pad = _round_up(B, bb)
    grid_steps = B_pad // bb

    x_p = x
    if B_pad != B:
        x_p = jnp.pad(x_p, ((0, B_pad - B), (0, 0)))     # only ragged small batches

    # x tile: deeper buffering once the grid is long enough to benefit.
    if grid_steps >= 3:
        x_spec = pl.BlockSpec((bb, x_dim), lambda i: (i, 0),
                              pipeline_mode=pl.Buffered(3))
    else:
        x_spec = pl.BlockSpec((bb, x_dim), lambda i: (i, 0))

    in_specs = [
        x_spec,                                          # x tile (batch-tiled)
        pl.BlockSpec((x_dim, hid), lambda i: (0, 0)),    # w1 (VMEM-resident)
        pl.BlockSpec((1, hid), lambda i: (0, 0)),        # b1
        pl.BlockSpec((hid, hid), lambda i: (0, 0)),      # w2
        pl.BlockSpec((1, hid), lambda i: (0, 0)),        # b2
        pl.BlockSpec((hid, y_pad), lambda i: (0, 0)),    # w3
        pl.BlockSpec((1, y_pad), lambda i: (0, 0)),      # b3
    ]
    out_specs = pl.BlockSpec((bb, y_pad), lambda i: (i, 0))

    flops = 2 * B_pad * (x_dim * hid + hid * hid + hid * y_pad)
    bytes_accessed = (
        int(x_p.size) * x_p.dtype.itemsize
        + sum(int(a.size) * a.dtype.itemsize for a in (w1, b1, w2, b2, w3, b3))
        + B_pad * y_pad * 2                              # bf16 output stream
    )

    out_padded = pl.pallas_call(
        _mlp_kernel,
        out_shape=jax.ShapeDtypeStruct((B_pad, y_pad), jnp.bfloat16),
        grid=(grid_steps,),
        in_specs=in_specs,
        out_specs=out_specs,
        compiler_params=pltpu.CompilerParams(
            dimension_semantics=("parallel",),
            vmem_limit_bytes=32 * 1024 * 1024,
        ),
        cost_estimate=pl.CostEstimate(
            flops=flops, transcendentals=0, bytes_accessed=bytes_accessed
        ),
    )(x_p, w1, b1, w2, b2, w3, b3)

    # Tiny slice + upcast (B x y_dim) back to the module's f32 logits.
    return out_padded[:B, :y_dim].astype(jnp.float32)


# --------------------------------------------------------------------------- #
# Parameter init / preparation
# --------------------------------------------------------------------------- #
def init_classifier_params(key, x_dim, y_dim, hidden=300):
    """Float32 params mimicking nn.Linear default init (uniform +-1/sqrt(fan_in)).
    Weights stored as (in_features, out_features); biases as (1, out_features)."""
    ks = jax.random.split(key, 6)

    def linear(kw, kb, fan_in, fan_out):
        bound = 1.0 / jnp.sqrt(fan_in)
        w = jax.random.uniform(kw, (fan_in, fan_out), jnp.float32, -bound, bound)
        b = jax.random.uniform(kb, (1, fan_out), jnp.float32, -bound, bound)
        return w, b

    w1, b1 = linear(ks[0], ks[1], x_dim, hidden)
    w2, b2 = linear(ks[2], ks[3], hidden, hidden)
    w3, b3 = linear(ks[4], ks[5], hidden, y_dim)
    return dict(w1=w1, b1=b1, w2=w2, b2=b2, w3=w3, b3=b3)


def prepare_classifier_params(raw):
    """Zero-pad hidden/output dims to multiples of 128, cast weights to bf16.
    Padded rows/columns are exactly zero so ReLU(0)=0 keeps logits unchanged.
    (x_dim is left as-is: layer 1 is ~3% of FLOPs, padding it buys nothing here.)"""
    w1, b1 = raw["w1"], raw["b1"]
    w2, b2 = raw["w2"], raw["b2"]
    w3, b3 = raw["w3"], raw["b3"]
    x_dim, hid = w1.shape
    y_dim = w3.shape[1]
    hp = _round_up(hid, _LANE)     # 300 -> 384 (3x128; optimal — do not pad to 512)
    yp = _round_up(y_dim, _LANE)   # 10  -> 128

    w1p = jnp.zeros((x_dim, hp), jnp.float32).at[:, :hid].set(w1).astype(jnp.bfloat16)
    b1p = jnp.zeros((1, hp), jnp.float32).at[:, :hid].set(b1)
    w2p = jnp.zeros((hp, hp), jnp.float32).at[:hid, :hid].set(w2).astype(jnp.bfloat16)
    b2p = jnp.zeros((1, hp), jnp.float32).at[:, :hid].set(b2)
    w3p = jnp.zeros((hp, yp), jnp.float32).at[:hid, :y_dim].set(w3).astype(jnp.bfloat16)
    b3p = jnp.zeros((1, yp), jnp.float32).at[:, :y_dim].set(b3)

    return dict(w1=w1p, b1=b1p, w2=w2p, b2=b2p, w3=w3p, b3=b3p,
                x_dim=x_dim, y_dim=y_dim)


# --------------------------------------------------------------------------- #
# References
# --------------------------------------------------------------------------- #
def classifier_reference_prepared(x, prep):
    """Pure-JAX reference matching the kernel's numerics exactly
    (bf16 operands, f32 MXU accumulation, bf16 final store)."""
    xb = x.astype(jnp.bfloat16)
    h = jnp.maximum(
        jnp.dot(xb, prep["w1"], preferred_element_type=jnp.float32) + prep["b1"], 0.0
    ).astype(jnp.bfloat16)
    h = jnp.maximum(
        jnp.dot(h, prep["w2"], preferred_element_type=jnp.float32) + prep["b2"], 0.0
    ).astype(jnp.bfloat16)
    out = (jnp.dot(h, prep["w3"], preferred_element_type=jnp.float32)
           + prep["b3"]).astype(jnp.bfloat16)
    return out[:, : prep["y_dim"]].astype(jnp.float32)


def classifier_reference_f32(x, raw):
    """Full-precision reference of the original module (loose check)."""
    h = jnp.maximum(x @ raw["w1"] + raw["b1"], 0.0)
    h = jnp.maximum(h @ raw["w2"] + raw["b2"], 0.0)
    return h @ raw["w3"] + raw["b3"]


# --------------------------------------------------------------------------- #
# Demo / self-check
# --------------------------------------------------------------------------- #
if __name__ == "__main__":
    key = jax.random.PRNGKey(0)
    k_x, k_x2, k_p = jax.random.split(key, 3)

    x_dim, y_dim = 32, 10
    raw = init_classifier_params(k_p, x_dim, y_dim)
    prep = prepare_classifier_params(raw)

    # ---- small batch (single grid step, ragged -> padded tile) ----------- #
    batch = 16
    x = jax.random.normal(k_x, (batch, x_dim), dtype=jnp.float32)
    out = jax.block_until_ready(classifier_forward(x, prep))
    assert out.shape == (batch, y_dim)
    ref_strict = classifier_reference_prepared(x, prep)
    assert jnp.allclose(out, ref_strict, atol=2e-2, rtol=2e-2), "small: mismatch vs bf16 ref"
    ref_f32 = classifier_reference_f32(x, raw)
    assert jnp.allclose(out, ref_f32, atol=6e-2, rtol=6e-2), "small: mismatch vs f32 ref"

    # ---- larger batch (multi-step grid, Buffered(3) x pipeline, 2-TC path) #
    batch2 = 4096
    x2 = jax.random.normal(k_x2, (batch2, x_dim), dtype=jnp.float32)
    out2 = jax.block_until_ready(classifier_forward(x2, prep, block_batch=1024))
    assert out2.shape == (batch2, y_dim)
    ref2_strict = classifier_reference_prepared(x2, prep)
    assert jnp.allclose(out2, ref2_strict, atol=2e-2, rtol=2e-2), "large: mismatch vs bf16 ref"
    ref2_f32 = classifier_reference_f32(x2, raw)
    assert jnp.allclose(out2, ref2_f32, atol=6e-2, rtol=6e-2), "large: mismatch vs f32 ref"

    print("KERNEL_OK")
</pallas_src>

<mosaic_0001>
module attributes {stable_mosaic.version = 11 : i64} {
  func.func @_mlp_kernel(%arg0: i32, %arg1: memref<16x32xf32, #tpu.memory_space<vmem>>, %arg2: memref<32x384xbf16, #tpu.memory_space<vmem>>, %arg3: memref<1x384xf32, #tpu.memory_space<vmem>>, %arg4: memref<384x384xbf16, #tpu.memory_space<vmem>>, %arg5: memref<1x384xf32, #tpu.memory_space<vmem>>, %arg6: memref<384x128xbf16, #tpu.memory_space<vmem>>, %arg7: memref<1x128xf32, #tpu.memory_space<vmem>>, %arg8: memref<16x128xbf16, #tpu.memory_space<vmem>>) attributes {dimension_semantics = [#tpu.dimension_semantics<parallel>], iteration_bounds = array<i64: 1>, scalar_prefetch = 0 : i64, scratch_operands = 0 : i64, tpu.core_type = #tpu.core_type<tc>, window_params = [{transform_indices = @transform_0, window_bounds = array<i64: 16, 32>}, {pipeline_mode = #tpu.pipeline_mode<synchronous>, transform_indices = @transform_1, window_bounds = array<i64: 32, 384>}, {pipeline_mode = #tpu.pipeline_mode<synchronous>, transform_indices = @transform_2, window_bounds = array<i64: 1, 384>}, {pipeline_mode = #tpu.pipeline_mode<synchronous>, transform_indices = @transform_3, window_bounds = array<i64: 384, 384>}, {pipeline_mode = #tpu.pipeline_mode<synchronous>, transform_indices = @transform_4, window_bounds = array<i64: 1, 384>}, {pipeline_mode = #tpu.pipeline_mode<synchronous>, transform_indices = @transform_5, window_bounds = array<i64: 384, 128>}, {pipeline_mode = #tpu.pipeline_mode<synchronous>, transform_indices = @transform_6, window_bounds = array<i64: 1, 128>}, {transform_indices = @transform_7, window_bounds = array<i64: 16, 128>}]} {
    %c0 = arith.constant 0 : index
    %c0_0 = arith.constant 0 : index
    %0 = vector.load %arg1[%c0, %c0_0] : memref<16x32xf32, #tpu.memory_space<vmem>>, vector<16x32xf32>
    %1 = arith.truncf %0 : vector<16x32xf32> to vector<16x32xbf16>
    %c0_1 = arith.constant 0 : index
    %c0_2 = arith.constant 0 : index
    %2 = vector.load %arg2[%c0_1, %c0_2] : memref<32x384xbf16, #tpu.memory_space<vmem>>, vector<32x384xbf16>
    %cst = arith.constant dense<0.000000e+00> : vector<16x384xf32>
    %3 = tpu.matmul %1, %2, %cst {dimension_numbers = #tpu.dot_dimension_numbers<[1], [0], [0], [1], [0, 0, 1, 1], [], []>} : vector<16x32xbf16>, vector<32x384xbf16>, vector<16x384xf32> -> vector<16x384xf32>
    %c0_3 = arith.constant 0 : index
    %c0_4 = arith.constant 0 : index
    %4 = vector.load %arg3[%c0_3, %c0_4] : memref<1x384xf32, #tpu.memory_space<vmem>>, vector<1x384xf32>
    %5 = vector.broadcast %4 : vector<1x384xf32> to vector<16x384xf32>
    %6 = arith.addf %3, %5 : vector<16x384xf32>
    %cst_5 = arith.constant 0.000000e+00 : f32
    %7 = vector.broadcast %cst_5 : f32 to vector<16x384xf32>
    %8 = arith.maximumf %6, %7 : vector<16x384xf32>
    %9 = arith.truncf %8 : vector<16x384xf32> to vector<16x384xbf16>
    %c0_6 = arith.constant 0 : index
    %c0_7 = arith.constant 0 : index
    %10 = vector.load %arg4[%c0_6, %c0_7] : memref<384x384xbf16, #tpu.memory_space<vmem>>, vector<384x384xbf16>
    %cst_8 = arith.constant dense<0.000000e+00> : vector<16x384xf32>
    %11 = tpu.matmul %9, %10, %cst_8 {dimension_numbers = #tpu.dot_dimension_numbers<[1], [0], [0], [1], [0, 0, 1, 1], [], []>} : vector<16x384xbf16>, vector<384x384xbf16>, vector<16x384xf32> -> vector<16x384xf32>
    %c0_9 = arith.constant 0 : index
    %c0_10 = arith.constant 0 : index
    %12 = vector.load %arg5[%c0_9, %c0_10] : memref<1x384xf32, #tpu.memory_space<vmem>>, vector<1x384xf32>
    %13 = vector.broadcast %12 : vector<1x384xf32> to vector<16x384xf32>
    %14 = arith.addf %11, %13 : vector<16x384xf32>
    %cst_11 = arith.constant 0.000000e+00 : f32
    %15 = vector.broadcast %cst_11 : f32 to vector<16x384xf32>
    %16 = arith.maximumf %14, %15 : vector<16x384xf32>
    %17 = arith.truncf %16 : vector<16x384xf32> to vector<16x384xbf16>
    %c0_12 = arith.constant 0 : index
    %c0_13 = arith.constant 0 : index
    %18 = vector.load %arg6[%c0_12, %c0_13] : memref<384x128xbf16, #tpu.memory_space<vmem>>, vector<384x128xbf16>
    %cst_14 = arith.constant dense<0.000000e+00> : vector<16x128xf32>
    %19 = tpu.matmul %17, %18, %cst_14 {dimension_numbers = #tpu.dot_dimension_numbers<[1], [0], [0], [1], [0, 0, 1, 1], [], []>} : vector<16x384xbf16>, vector<384x128xbf16>, vector<16x128xf32> -> vector<16x128xf32>
    %c0_15 = arith.constant 0 : index
    %c0_16 = arith.constant 0 : index
    %20 = vector.load %arg7[%c0_15, %c0_16] : memref<1x128xf32, #tpu.memory_space<vmem>>, vector<1x128xf32>
    %21 = vector.broadcast %20 : vector<1x128xf32> to vector<16x128xf32>
    %22 = arith.addf %19, %21 : vector<16x128xf32>
    %23 = arith.truncf %22 : vector<16x128xf32> to vector<16x128xbf16>
    %c0_17 = arith.constant 0 : index
    %c0_18 = arith.constant 0 : index
    %24 = vector.load %arg8[%c0_17, %c0_18] : memref<16x128xbf16, #tpu.memory_space<vmem>>, vector<16x128xbf16>
    tpu.vector_store %arg8[%c0_17, %c0_18], %23 {strides = array<i32>} : memref<16x128xbf16, #tpu.memory_space<vmem>>, vector<16x128xbf16>,
    return
  }
  func.func @transform_0(%arg0: i32) -> (i32, i32) {
    %c0_i32 = arith.constant 0 : i32
    %c0_i32_0 = arith.constant 0 : i32
    return %arg0, %c0_i32 : i32, i32
  }
  func.func @transform_1(%arg0: i32) -> (i32, i32) {
    %c0_i32 = arith.constant 0 : i32
    %c0_i32_0 = arith.constant 0 : i32
    %c0_i32_1 = arith.constant 0 : i32
    return %c0_i32, %c0_i32_0 : i32, i32
  }
  func.func @transform_2(%arg0: i32) -> (i32, i32) {
    %c0_i32 = arith.constant 0 : i32
    %c0_i32_0 = arith.constant 0 : i32
    %c0_i32_1 = arith.constant 0 : i32
    return %c0_i32, %c0_i32_0 : i32, i32
  }
  func.func @transform_3(%arg0: i32) -> (i32, i32) {
    %c0_i32 = arith.constant 0 : i32
    %c0_i32_0 = arith.constant 0 : i32
    %c0_i32_1 = arith.constant 0 : i32
    return %c0_i32, %c0_i32_0 : i32, i32
  }
  func.func @transform_4(%arg0: i32) -> (i32, i32) {
    %c0_i32 = arith.constant 0 : i32
    %c0_i32_0 = arith.constant 0 : i32
    %c0_i32_1 = arith.constant 0 : i32
    return %c0_i32, %c0_i32_0 : i32, i32
  }
  func.func @transform_5(%arg0: i32) -> (i32, i32) {
    %c0_i32 = arith.constant 0 : i32
    %c0_i32_0 = arith.constant 0 : i32
    %c0_i32_1 = arith.constant 0 : i32
    return %c0_i32, %c0_i32_0 : i32, i32
  }
  func.func @transform_6(%arg0: i32) -> (i32, i32) {
    %c0_i32 = arith.constant 0 : i32
    %c0_i32_0 = arith.constant 0 : i32
    %c0_i32_1 = arith.constant 0 : i32
    return %c0_i32, %c0_i32_0 : i32, i32
  }
  func.func @transform_7(%arg0: i32) -> (i32, i32) {
    %c0_i32 = arith.constant 0 : i32
    %c0_i32_0 = arith.constant 0 : i32
    return %arg0, %c0_i32 : i32, i32
  }
}

</mosaic_0001>

<llo_original>
// kernel: tpu_custom_call.1
$region0: #{tpu_custom_call.1}
  #allocation0 [shape = 'u32[]', space=smem, size = 0x4, offset = 0x4, fixed_abs, tag = 'smem constant byte address 0x4 - core index']
  #allocation1 [shape = 'u32[144,128]{1,0:T(1,128)}', space=vmem, size = 0x12000, scoped, tag = 'internal scratch']
  %s0 = inlined_call_operand.hbm [shape: f32[16,32], index: 0, kind: input, shape index: {}]
  %s1 = inlined_call_operand.hbm [shape: bf16[32,384], index: 1, kind: input, shape index: {}]
  %s2 = inlined_call_operand.vmem [shape: f32[1,384], index: 2, kind: input, shape index: {}]
  %s3 = inlined_call_operand.hbm [shape: bf16[384,384], index: 3, kind: input, shape index: {}]
  %s4 = inlined_call_operand.vmem [shape: f32[1,384], index: 4, kind: input, shape index: {}]
  %s5 = inlined_call_operand.hbm [shape: bf16[384,128], index: 5, kind: input, shape index: {}]
  %s6 = inlined_call_operand.vmem [shape: f32[1,128], index: 6, kind: input, shape index: {}]
  %s7 = inlined_call_operand.hbm [shape: bf16[16,128], index: 7, kind: output, shape index: {}]
  %s8 = sld [smem:[#allocation0]]
  $region54: #{tpu_custom_call.1} parent=0
    _
  %s10 = ssub.s32 1, %s8
  %s11 = scalar_select 0, %s10, %s8
  $region1: #{tpu_custom_call.1} parent=0
    #allocation2 [shape = 'u8[8192]{0}', space=vmem, size = 0x2000, scoped, tag = 'input window, operand 0, single buffered']
    #allocation3 [shape = 's32[1]{0}', space=sflag, size = 0x4, scoped, tag = 'scoped memory for tpu_custom_call.1']
    #allocation4 [shape = 's32[1]{0}', space=sflag, size = 0x4, scoped, tag = 'scoped memory for tpu_custom_call.1']
    #allocation5 [shape = 'u8[24576]{0}', space=vmem, size = 0x6000, scoped, tag = 'input window, operand 1, single buffered']
    #allocation6 [shape = 's32[1]{0}', space=sflag, size = 0x4, scoped, tag = 'scoped memory for tpu_custom_call.1']
    #allocation7 [shape = 'u8[294912]{0}', space=vmem, size = 0x48000, scoped, tag = 'input window, operand 3, single buffered']
    #allocation8 [shape = 'u8[98304]{0}', space=vmem, size = 0x18000, scoped, tag = 'input window, operand 5, single buffered']
    #allocation9 [shape = 's32[1]{0}', space=sflag, size = 0x4, scoped, tag = 'scoped memory for tpu_custom_call.1']
    #allocation10 [shape = 'u8[4096]{0}', space=vmem, size = 0x1000, scoped, tag = 'output window, operand 0, single buffered']
    %12 = vsyncpa [#allocation3], 0
    %13 = vsyncpa [#allocation6], 0
    %14 = vsyncpa [#allocation9], 0
    %15 = vsyncpa [#allocation4], 0
    // Predicated region
    $region2: #{tpu_custom_call.1} parent=1 // pred_check
      _
    $region3: #{tpu_custom_call.1} parent=1 // pred_check_branch
      %17 = sbr.rel (0) target = $region5
    $region4: #{tpu_custom_call.1} parent=1 // pred_region
      %s19 = ssub.s32 256, 256
      %20 = vsyncadd [#allocation3], %s19
      %s21 = sshll.u32 [#allocation2], 4
      %s22 = int_to_ptr.vmem [resolvable:$true] %s21
      %27 = dma.hbm_to_vmem [thread:$0]  %s0, 256, %s22, [#allocation3], 128, 128, 8
    $region5: #{tpu_custom_call.1} parent=1 // pred_fallthru
      _
    // Predicated region
    $region6: #{tpu_custom_call.1} parent=1 // pred_check
      _
    $region7: #{tpu_custom_call.1} parent=1 // pred_check_branch
      %29 = sbr.rel (0) target = $region9
    $region8: #{tpu_custom_call.1} parent=1 // pred_region
      %s31 = ssub.s32 768, 768
      %32 = vsyncadd [#allocation6], %s31
      %s33 = sshll.u32 [#allocation5], 4
      %s34 = int_to_ptr.vmem [resolvable:$true] %s33
      %39 = dma.hbm_to_vmem [thread:$0]  %s1, 768, %s34, [#allocation6], 192, 192, 12
    $region9: #{tpu_custom_call.1} parent=1 // pred_fallthru
      _
    // Predicated region
    $region10: #{tpu_custom_call.1} parent=1 // pred_check
      _
    $region11: #{tpu_custom_call.1} parent=1 // pred_check_branch
      %41 = sbr.rel (0) target = $region13
    $region12: #{tpu_custom_call.1} parent=1 // pred_region
      _
    $region13: #{tpu_custom_call.1} parent=1 // pred_fallthru
      _
    // Predicated region
    $region14: #{tpu_custom_call.1} parent=1 // pred_check
      _
    $region15: #{tpu_custom_call.1} parent=1 // pred_check_branch
      %43 = sbr.rel (0) target = $region17
    $region16: #{tpu_custom_call.1} parent=1 // pred_region
      %s45 = ssub.s32 9216, 9216
      %46 = vsyncadd [#allocation6], %s45
      %s47 = sshll.u32 [#allocation7], 4
      %s48 = int_to_ptr.vmem [resolvable:$true] %s47
      %53 = dma.hbm_to_vmem [thread:$0]  %s3, 9216, %s48, [#allocation6], 192, 192, 12
    $region17: #{tpu_custom_call.1} parent=1 // pred_fallthru
      _
    // Predicated region
    $region18: #{tpu_custom_call.1} parent=1 // pred_check
      _
    $region19: #{tpu_custom_call.1} parent=1 // pred_check_branch
      %55 = sbr.rel (0) target = $region21
    $region20: #{tpu_custom_call.1} parent=1 // pred_region
      _
    $region21: #{tpu_custom_call.1} parent=1 // pred_fallthru
      _
    // Predicated region
    $region22: #{tpu_custom_call.1} parent=1 // pred_check
      _
    $region23: #{tpu_custom_call.1} parent=1 // pred_check_branch
      %57 = sbr.rel (0) target = $region25
    $region24: #{tpu_custom_call.1} parent=1 // pred_region
      %s59 = ssub.s32 3072, 3072
      %60 = vsyncadd [#allocation9], %s59
      %s61 = sshll.u32 [#allocation8], 4
      %s62 = int_to_ptr.vmem [resolvable:$true] %s61
      %67 = dma.hbm_to_vmem [thread:$0]  %s5, 3072, %s62, [#allocation9], 64, 64, 4
    $region25: #{tpu_custom_call.1} parent=1 // pred_fallthru
      _
    // Predicated region
    $region26: #{tpu_custom_call.1} parent=1 // pred_check
      _
    $region27: #{tpu_custom_call.1} parent=1 // pred_check_branch
      %69 = sbr.rel (0) target = $region29
    $region28: #{tpu_custom_call.1} parent=1 // pred_region
      _
    $region29: #{tpu_custom_call.1} parent=1 // pred_fallthru
      _
    // Predicated region
    $region30: #{tpu_custom_call.1} parent=1 // pred_check
      _
    $region31: #{tpu_custom_call.1} parent=1 // pred_check_branch
      %71 = sbr.rel (0) target = $region33
    $region32: #{tpu_custom_call.1} parent=1 // pred_region
      %72 = dma.done [#allocation3], 256
    $region33: #{tpu_custom_call.1} parent=1 // pred_fallthru
      _
    // Predicated region
    $region34: #{tpu_custom_call.1} parent=1 // pred_check
      _
    $region35: #{tpu_custom_call.1} parent=1 // pred_check_branch
      %74 = sbr.rel (0) target = $region37
    $region36: #{tpu_custom_call.1} parent=1 // pred_region
      %75 = dma.done [#allocation6], 768
    $region37: #{tpu_custom_call.1} parent=1 // pred_fallthru
      _
    // Predicated region
    $region38: #{tpu_custom_call.1} parent=1 // pred_check
      _
    $region39: #{tpu_custom_call.1} parent=1 // pred_check_branch
      %77 = sbr.rel (0) target = $region41
    $region40: #{tpu_custom_call.1} parent=1 // pred_region
      %78 = dma.done [#allocation6], 9216
    $region41: #{tpu_custom_call.1} parent=1 // pred_fallthru
      _
    // Predicated region
    $region42: #{tpu_custom_call.1} parent=1 // pred_check
      _
    $region43: #{tpu_custom_call.1} parent=1 // pred_check_branch
      %80 = sbr.rel (0) target = $region45
    $region44: #{tpu_custom_call.1} parent=1 // pred_region
      %81 = dma.done [#allocation9], 3072
    $region45: #{tpu_custom_call.1} parent=1 // pred_fallthru
      _
    %v83 = vld [vmem:[#allocation2] sm:$0xff]
    %v84 = vld [vmem:[#allocation2 + $0x8] sm:$0xff]
    %v85 = vpack.c.bf16 %v84, %v83
    %v86 = vld [vmem:[#allocation5] sm:$0xff]
    %v87 = vld [vmem:[#allocation5 + $0x8] sm:$0xf]
    %v88 = vld [vmem:[#allocation5 + $0xc] sm:$0xff]
    %v89 = vld [vmem:[#allocation5 + $0x14] sm:$0xf]
    %v90 = vld [vmem:[#allocation5 + $0x18] sm:$0xff]
    %v91 = vld [vmem:[#allocation5 + $0x20] sm:$0xf]
    %v92 = vld [vmem:[#allocation5 + $0x24] sm:$0xff]
    %v93 = vld [vmem:[#allocation5 + $0x2c] sm:$0xf]
    %v94 = vld [vmem:[%s2] sm:$0x7]
    %v96 = vlaneseq
    %v97 = vshrl.u32 %v96, 7
    %v98 = vsub.s32 0, %v97
    %v99 = vrot.slane %v94, %v98
    %v100 = vlaneseq
    %v101 = vshrl.u32 %v100, 7
    %v102 = vsub.s32 1, %v101
    %v103 = vrot.slane %v94, %v102
    %v104 = vlaneseq
    %v105 = vshrl.u32 %v104, 7
    %v106 = vsub.s32 2, %v105
    %v107 = vrot.slane %v94, %v106
    %v119 = vunpack.c.l.b16 %v86
    %v120 = vunpack.c.h.b16 %v86
    %v121 = vunpack.c.l.b16 %v87
    %v122 = vunpack.c.l.b16 %v88
    %v123 = vunpack.c.h.b16 %v88
    %v124 = vunpack.c.l.b16 %v89
    %v125 = vunpack.c.l.b16 %v90
    %v126 = vunpack.c.h.b16 %v90
    %v127 = vunpack.c.l.b16 %v91
    %v128 = vunpack.c.l.b16 %v92
    %v129 = vunpack.c.h.b16 %v92
    %v130 = vunpack.c.l.b16 %v93
    %v131 = vpack.c.b16 %v122, %v119
    %v132 = vpack.c.b16 %v123, %v120
    %v133 = vpack.c.b16 %v124, %v121
    %v134 = vpack.c.b16 %v128, %v125
    %v135 = vpack.c.b16 %v129, %v126
    %v136 = vpack.c.b16 %v130, %v127
    %vm143 = vcmask 261120
    %v145 = vsel %vm143, %v85, 0
    %147 = vmatprep.subr.bf16.mxu0 0
    %148 = vmatpush1.bf16.msra.mxu0 0
    %149 = vmatprep.subr.bf16.mxu0 0
    %150 = vmatpush1.bf16.msra.mxu0 0
    %151 = vmatprep.subr.bf16.mxu0 0
    %152 = vmatpush1.bf16.msra.mxu0 0
    %153 = vmatprep.subr.bf16.mxu0 0
    %154 = vmatpush1.bf16.msra.mxu0 0
    %155 = vmatprep.subr.bf16.mxu0 0
    %156 = vmatpush1.bf16.msra.mxu0 0
    %157 = vmatprep.subr.bf16.mxu0 0
    %158 = vmatpush1.bf16.msra.mxu0 0
    %159 = vmatprep.subr.bf16.mxu0 %v135
    %160 = vmatpush1.bf16.msra.mxu0 %v134
    %161 = vmatprep.subr.bf16.mxu0 %v132
    %162 = vmatpush1.bf16.msra.mxu0 %v131
    %163 = vmatprep.subr.bf16.mxu0 0
    %164 = vmatpush2.bf16.msra.mxu0 0
    %165 = vmatprep.subr.bf16.mxu0 0
    %166 = vmatpush2.bf16.msra.mxu0 0
    %167 = vmatprep.subr.bf16.mxu0 0
    %168 = vmatpush2.bf16.msra.mxu0 0
    %169 = vmatprep.subr.bf16.mxu0 0
    %170 = vmatpush2.bf16.msra.mxu0 0
    %171 = vmatprep.subr.bf16.mxu0 0
    %172 = vmatpush2.bf16.msra.mxu0 0
    %173 = vmatprep.subr.bf16.mxu0 0
    %174 = vmatpush2.bf16.msra.mxu0 0
    %175 = vmatprep.subr.bf16.mxu0 0
    %176 = vmatpush2.bf16.msra.mxu0 0
    %177 = vmatprep.subr.bf16.mxu0 0
    %178 = vmatpush2.bf16.msra.mxu0 0
    %179 = vmatprep.mubr.bf16.mxu0 0
    %180 = vmatmul.mubr.bf16.gmra.mxu0 %v145
    %v181 = vpop.f32.mrf.mxu0
    %v182 = vadd.f32 %v99, %v181
    %v183 = vpop.f32.mrf.mxu0
    %v184 = vadd.f32 %v103, %v183
    %v185 = vpop.f32.mrf.mxu0
    %v186 = vadd.f32 %v99, %v185
    %v187 = vpop.f32.mrf.mxu0
    %v188 = vadd.f32 %v103, %v187
    %189 = vdwg.mxu0
    %190 = vmatprep.subr.bf16.mxu0 0
    %191 = vmatpush1.bf16.msra.mxu0 0
    %192 = vmatprep.subr.bf16.mxu0 0
    %193 = vmatpush1.bf16.msra.mxu0 0
    %194 = vmatprep.subr.bf16.mxu0 0
    %195 = vmatpush1.bf16.msra.mxu0 0
    %196 = vmatprep.subr.bf16.mxu0 0
    %197 = vmatpush1.bf16.msra.mxu0 0
    %198 = vmatprep.subr.bf16.mxu0 0
    %199 = vmatpush1.bf16.msra.mxu0 0
    %200 = vmatprep.subr.bf16.mxu0 0
    %201 = vmatpush1.bf16.msra.mxu0 0
    %202 = vmatprep.subr.bf16.mxu0 0
    %203 = vmatpush1.bf16.msra.mxu0 %v136
    %204 = vmatprep.subr.bf16.mxu0 0
    %205 = vmatpush1.bf16.msra.mxu0 %v133
    %206 = vmatprep.subr.bf16.mxu0 0
    %207 = vmatpush2.bf16.msra.mxu0 0
    %208 = vmatprep.subr.bf16.mxu0 0
    %209 = vmatpush2.bf16.msra.mxu0 0
    %210 = vmatprep.subr.bf16.mxu0 0
    %211 = vmatpush2.bf16.msra.mxu0 0
    %212 = vmatprep.subr.bf16.mxu0 0
    %213 = vmatpush2.bf16.msra.mxu0 0
    %214 = vmatprep.subr.bf16.mxu0 0
    %215 = vmatpush2.bf16.msra.mxu0 0
    %216 = vmatprep.subr.bf16.mxu0 0
    %217 = vmatpush2.bf16.msra.mxu0 0
    %218 = vmatprep.subr.bf16.mxu0 0
    %219 = vmatpush2.bf16.msra.mxu0 0
    %220 = vmatprep.subr.bf16.mxu0 0
    %221 = vmatpush2.bf16.msra.mxu0 0
    %222 = vmatprep.mubr.bf16.mxu0 0
    %223 = vmatmul.mubr.bf16.gmra.mxu0 %v145
    %v224 = vpop.f32.mrf.mxu0
    %v225 = vadd.f32 %v107, %v224
    %v226 = vpop.f32.mrf.mxu0
    %v227 = vpop.f32.mrf.mxu0
    %v228 = vadd.f32 %v107, %v227
    %v229 = vpop.f32.mrf.mxu0
    %230 = vdwg.mxu0
    %v231 = vmax.f32 %v182, 0.0
    %v232 = vmax.f32 %v184, 0.0
    %v233 = vmax.f32 %v225, 0.0
    %v234 = vmax.f32 %v186, 0.0
    %v235 = vmax.f32 %v188, 0.0
    %v236 = vmax.f32 %v228, 0.0
    %v237 = vpack.c.bf16 %v234, %v231
    %v238 = vpack.c.bf16 %v235, %v232
    %v239 = vpack.c.bf16 %v236, %v233
    %v240 = vld [vmem:[#allocation7] sm:$0xff]
    %v241 = vld [vmem:[#allocation7 + $0x8] sm:$0xf]
    %v242 = vld [vmem:[#allocation7 + $0xc] sm:$0xff]
    %v243 = vld [vmem:[#allocation7 + $0x14] sm:$0xf]
    %v244 = vld [vmem:[#allocation7 + $0x18] sm:$0xff]
    %v245 = vld [vmem:[#allocation7 + $0x20] sm:$0xf]
    %v246 = vld [vmem:[#allocation7 + $0x24] sm:$0xff]
    %v247 = vld [vmem:[#allocation7 + $0x2c] sm:$0xf]
    %v248 = vld [vmem:[#allocation7 + $0x30] sm:$0xff]
    %v249 = vld [vmem:[#allocation7 + $0x38] sm:$0xf]
    %v250 = vld [vmem:[#allocation7 + $0x3c] sm:$0xff]
    %v251 = vld [vmem:[#allocation7 + $0x44] sm:$0xf]
    %v252 = vld [vmem:[#allocation7 + $0x48] sm:$0xff]
    %v253 = vld [vmem:[#allocation7 + $0x50] sm:$0xf]
    %v254 = vld [vmem:[#allocation7 + $0x54] sm:$0xff]
    %v255 = vld [vmem:[#allocation7 + $0x5c] sm:$0xf]
    %v256 = vld [vmem:[#allocation7 + $0x60] sm:$0xff]
    %v257 = vld [vmem:[#allocation7 + $0x68] sm:$0xf]
    %v258 = vld [vmem:[#allocation7 + $0x6c] sm:$0xff]
    %v259 = vld [vmem:[#allocation7 + $0x74] sm:$0xf]
    %v260 = vld [vmem:[#allocation7 + $0x78] sm:$0xff]
    %v261 = vld [vmem:[#allocation7 + $0x80] sm:$0xf]
    %v262 = vld [vmem:[#allocation7 + $0x84] sm:$0xff]
    %v263 = vld [vmem:[#allocation7 + $0x8c] sm:$0xf]
    %v264 = vld [vmem:[#allocation7 + $0x90] sm:$0xff]
    %v265 = vld [vmem:[#allocation7 + $0x98] sm:$0xf]
    %v266 = vld [vmem:[#allocation7 + $0x9c] sm:$0xff]
    %v267 = vld [vmem:[#allocation7 + $0xa4] sm:$0xf]
    %v268 = vld [vmem:[#allocation7 + $0xa8] sm:$0xff]
    %v269 = vld [vmem:[#allocation7 + $0xb0] sm:$0xf]
    %v270 = vld [vmem:[#allocation7 + $0xb4] sm:$0xff]
    %v271 = vld [vmem:[#allocation7 + $0xbc] sm:$0xf]
    %v272 = vld [vmem:[#allocation7 + $0xc0] sm:$0xff]
    %v273 = vld [vmem:[#allocation7 + $0xc8] sm:$0xf]
    %v274 = vld [vmem:[#allocation7 + $0xcc] sm:$0xff]
    %v275 = vld [vmem:[#allocation7 + $0xd4] sm:$0xf]
    %v276 = vld [vmem:[#allocation7 + $0xd8] sm:$0xff]
    %v277 = vld [vmem:[#allocation7 + $0xe0] sm:$0xf]
    %v278 = vld [vmem:[#allocation7 + $0xe4] sm:$0xff]
    %v279 = vld [vmem:[#allocation7 + $0xec] sm:$0xf]
    %v280 = vld [vmem:[#allocation7 + $0xf0] sm:$0xff]
    %v281 = vld [vmem:[#allocation7 + $0xf8] sm:$0xf]
    %v282 = vld [vmem:[#allocation7 + $0xfc] sm:$0xff]
    %v283 = vld [vmem:[#allocation7 + $0x104] sm:$0xf]
    %v284 = vld [vmem:[#allocation7 + $0x108] sm:$0xff]
    %v285 = vld [vmem:[#allocation7 + $0x110] sm:$0xf]
    %v286 = vld [vmem:[#allocation7 + $0x114] sm:$0xff]
    %v287 = vld [vmem:[#allocation7 + $0x11c] sm:$0xf]
    %v288 = vld [vmem:[#allocation7 + $0x120] sm:$0xff]
    %v289 = vld [vmem:[#allocation7 + $0x128] sm:$0xf]
    %v290 = vld [vmem:[#allocation7 + $0x12c] sm:$0xff]
    %v291 = vld [vmem:[#allocation7 + $0x134] sm:$0xf]
    %v292 = vld [vmem:[#allocation7 + $0x138] sm:$0xff]
    %v293 = vld [vmem:[#allocation7 + $0x140] sm:$0xf]
    %v294 = vld [vmem:[#allocation7 + $0x144] sm:$0xff]
    %v295 = vld [vmem:[#allocation7 + $0x14c] sm:$0xf]
    %v296 = vld [vmem:[#allocation7 + $0x150] sm:$0xff]
    %v297 = vld [vmem:[#allocation7 + $0x158] sm:$0xf]
    %v298 = vld [vmem:[#allocation7 + $0x15c] sm:$0xff]
    %v299 = vld [vmem:[#allocation7 + $0x164] sm:$0xf]
    %v300 = vld [vmem:[#allocation7 + $0x168] sm:$0xff]
    %v301 = vld [vmem:[#allocation7 + $0x170] sm:$0xf]
    %v302 = vld [vmem:[#allocation7 + $0x174] sm:$0xff]
    %v303 = vld [vmem:[#allocation7 + $0x17c] sm:$0xf]
    %v304 = vld [vmem:[#allocation7 + $0x180] sm:$0xff]
    %v305 = vld [vmem:[#allocation7 + $0x188] sm:$0xf]
    %v306 = vld [vmem:[#allocation7 + $0x18c] sm:$0xff]
    %v307 = vld [vmem:[#allocation7 + $0x194] sm:$0xf]
    %v308 = vld [vmem:[#allocation7 + $0x198] sm:$0xff]
    %v309 = vld [vmem:[#allocation7 + $0x1a0] sm:$0xf]
    %v310 = vld [vmem:[#allocation7 + $0x1a4] sm:$0xff]
    %v311 = vld [vmem:[#allocation7 + $0x1ac] sm:$0xf]
    %v312 = vld [vmem:[#allocation7 + $0x1b0] sm:$0xff]
    %v313 = vld [vmem:[#allocation7 + $0x1b8] sm:$0xf]
    %v314 = vld [vmem:[#allocation7 + $0x1bc] sm:$0xff]
    %v315 = vld [vmem:[#allocation7 + $0x1c4] sm:$0xf]
    %v316 = vld [vmem:[#allocation7 + $0x1c8] sm:$0xff]
    %v317 = vld [vmem:[#allocation7 + $0x1d0] sm:$0xf]
    %v318 = vld [vmem:[#allocation7 + $0x1d4] sm:$0xff]
    %v319 = vld [vmem:[#allocation7 + $0x1dc] sm:$0xf]
    %v320 = vld [vmem:[#allocation7 + $0x1e0] sm:$0xff]
    %v321 = vld [vmem:[#allocation7 + $0x1e8] sm:$0xf]
    %v322 = vld [vmem:[#allocation7 + $0x1ec] sm:$0xff]
    %v323 = vld [vmem:[#allocation7 + $0x1f4] sm:$0xf]
    %v324 = vld [vmem:[#allocation7 + $0x1f8] sm:$0xff]
    %v325 = vld [vmem:[#allocation7 + $0x200] sm:$0xf]
    %v326 = vld [vmem:[#allocation7 + $0x204] sm:$0xff]
    %v327 = vld [vmem:[#allocation7 + $0x20c] sm:$0xf]
    %v328 = vld [vmem:[#allocation7 + $0x210] sm:$0xff]
    %v329 = vld [vmem:[#allocation7 + $0x218] sm:$0xf]
    %v330 = vld [vmem:[#allocation7 + $0x21c] sm:$0xff]
    %v331 = vld [vmem:[#allocation7 + $0x224] sm:$0xf]
    %v332 = vld [vmem:[#allocation7 + $0x228] sm:$0xff]
    %v333 = vld [vmem:[#allocation7 + $0x230] sm:$0xf]
    %v334 = vld [vmem:[#allocation7 + $0x234] sm:$0xff]
    %v335 = vld [vmem:[#allocation7 + $0x23c] sm:$0xf]
    %v336 = vld [vmem:[%s4] sm:$0x7]
    %v338 = vlaneseq
    %v339 = vshrl.u32 %v338, 7
    %v340 = vsub.s32 0, %v339
    %v341 = vrot.slane %v336, %v340
    %v342 = vlaneseq
    %v343 = vshrl.u32 %v342, 7
    %v344 = vsub.s32 1, %v343
    %v345 = vrot.slane %v336, %v344
    %v346 = vlaneseq
    %v347 = vshrl.u32 %v346, 7
    %v348 = vsub.s32 2, %v347
    %v349 = vrot.slane %v336, %v348
    %v449 = vunpack.c.l.b16 %v240
    %v450 = vunpack.c.h.b16 %v240
    %v451 = vunpack.c.l.b16 %v241
    %v452 = vunpack.c.l.b16 %v242
    %v453 = vunpack.c.h.b16 %v242
    %v454 = vunpack.c.l.b16 %v243
    %v455 = vunpack.c.l.b16 %v244
    %v456 = vunpack.c.h.b16 %v244
    %v457 = vunpack.c.l.b16 %v245
    %v458 = vunpack.c.l.b16 %v246
    %v459 = vunpack.c.h.b16 %v246
    %v460 = vunpack.c.l.b16 %v247
    %v461 = vunpack.c.l.b16 %v248
    %v462 = vunpack.c.h.b16 %v248
    %v463 = vunpack.c.l.b16 %v249
    %v464 = vunpack.c.l.b16 %v250
    %v465 = vunpack.c.h.b16 %v250
    %v466 = vunpack.c.l.b16 %v251
    %v467 = vunpack.c.l.b16 %v252
    %v468 = vunpack.c.h.b16 %v252
    %v469 = vunpack.c.l.b16 %v253
    %v470 = vunpack.c.l.b16 %v254
    %v471 = vunpack.c.h.b16 %v254
    %v472 = vunpack.c.l.b16 %v255
    %v473 = vunpack.c.l.b16 %v256
    %v474 = vunpack.c.h.b16 %v256
    %v475 = vunpack.c.l.b16 %v257
    %v476 = vunpack.c.l.b16 %v258
    %v477 = vunpack.c.h.b16 %v258
    %v478 = vunpack.c.l.b16 %v259
    %v479 = vunpack.c.l.b16 %v260
    %v480 = vunpack.c.h.b16 %v260
    %v481 = vunpack.c.l.b16 %v261
    %v482 = vunpack.c.l.b16 %v262
    %v483 = vunpack.c.h.b16 %v262
    %v484 = vunpack.c.l.b16 %v263
    %v485 = vunpack.c.l.b16 %v264
    %v486 = vunpack.c.h.b16 %v264
    %v487 = vunpack.c.l.b16 %v265
    %v488 = vunpack.c.l.b16 %v266
    %v489 = vunpack.c.h.b16 %v266
    %v490 = vunpack.c.l.b16 %v267
    %v491 = vunpack.c.l.b16 %v268
    %v492 = vunpack.c.h.b16 %v268
    %v493 = vunpack.c.l.b16 %v269
    %v494 = vunpack.c.l.b16 %v270
    %v495 = vunpack.c.h.b16 %v270
    %v496 = vunpack.c.l.b16 %v271
    %v497 = vunpack.c.l.b16 %v272
    %v498 = vunpack.c.h.b16 %v272
    %v499 = vunpack.c.l.b16 %v273
    %v500 = vunpack.c.l.b16 %v274
    %v501 = vunpack.c.h.b16 %v274
    %v502 = vunpack.c.l.b16 %v275
    %v503 = vunpack.c.l.b16 %v276
    %v504 = vunpack.c.h.b16 %v276
    %v505 = vunpack.c.l.b16 %v277
    %v506 = vunpack.c.l.b16 %v278
    %v507 = vunpack.c.h.b16 %v278
    %v508 = vunpack.c.l.b16 %v279
    %v509 = vunpack.c.l.b16 %v280
    %v510 = vunpack.c.h.b16 %v280
    %v511 = vunpack.c.l.b16 %v281
    %v512 = vunpack.c.l.b16 %v282
    %v513 = vunpack.c.h.b16 %v282
    %v514 = vunpack.c.l.b16 %v283
    %v515 = vunpack.c.l.b16 %v284
    %v516 = vunpack.c.h.b16 %v284
    %v517 = vunpack.c.l.b16 %v285
    %v518 = vunpack.c.l.b16 %v286
    %v519 = vunpack.c.h.b16 %v286
    %v520 = vunpack.c.l.b16 %v287
    %v521 = vunpack.c.l.b16 %v288
    %v522 = vunpack.c.h.b16 %v288
    %v523 = vunpack.c.l.b16 %v289
    %v524 = vunpack.c.l.b16 %v290
    %v525 = vunpack.c.h.b16 %v290
    %v526 = vunpack.c.l.b16 %v291
    %v527 = vunpack.c.l.b16 %v292
    %v528 = vunpack.c.h.b16 %v292
    %v529 = vunpack.c.l.b16 %v293
    %v530 = vunpack.c.l.b16 %v294
    %v531 = vunpack.c.h.b16 %v294
    %v532 = vunpack.c.l.b16 %v295
    %v533 = vunpack.c.l.b16 %v296
    %v534 = vunpack.c.h.b16 %v296
    %v535 = vunpack.c.l.b16 %v297
    %v536 = vunpack.c.l.b16 %v298
    %v537 = vunpack.c.h.b16 %v298
    %v538 = vunpack.c.l.b16 %v299
    %v539 = vunpack.c.l.b16 %v300
    %v540 = vunpack.c.h.b16 %v300
    %v541 = vunpack.c.l.b16 %v301
    %v542 = vunpack.c.l.b16 %v302
    %v543 = vunpack.c.h.b16 %v302
    %v544 = vunpack.c.l.b16 %v303
    %v545 = vunpack.c.l.b16 %v304
    %v546 = vunpack.c.h.b16 %v304
    %v547 = vunpack.c.l.b16 %v305
    %v548 = vunpack.c.l.b16 %v306
    %v549 = vunpack.c.h.b16 %v306
    %v550 = vunpack.c.l.b16 %v307
    %v551 = vunpack.c.l.b16 %v308
    %v552 = vunpack.c.h.b16 %v308
    %v553 = vunpack.c.l.b16 %v309
    %v554 = vunpack.c.l.b16 %v310
    %v555 = vunpack.c.h.b16 %v310
    %v556 = vunpack.c.l.b16 %v311
    %v557 = vunpack.c.l.b16 %v312
    %v558 = vunpack.c.h.b16 %v312
    %v559 = vunpack.c.l.b16 %v313
    %v560 = vunpack.c.l.b16 %v314
    %v561 = vunpack.c.h.b16 %v314
    %v562 = vunpack.c.l.b16 %v315
    %v563 = vunpack.c.l.b16 %v316
    %v564 = vunpack.c.h.b16 %v316
    %v565 = vunpack.c.l.b16 %v317
    %v566 = vunpack.c.l.b16 %v318
    %v567 = vunpack.c.h.b16 %v318
    %v568 = vunpack.c.l.b16 %v319
    %v569 = vunpack.c.l.b16 %v320
    %v570 = vunpack.c.h.b16 %v320
    %v571 = vunpack.c.l.b16 %v321
    %v572 = vunpack.c.l.b16 %v322
    %v573 = vunpack.c.h.b16 %v322
    %v574 = vunpack.c.l.b16 %v323
    %v575 = vunpack.c.l.b16 %v324
    %v576 = vunpack.c.h.b16 %v324
    %v577 = vunpack.c.l.b16 %v325
    %v578 = vunpack.c.l.b16 %v326
    %v579 = vunpack.c.h.b16 %v326
    %v580 = vunpack.c.l.b16 %v327
    %v581 = vunpack.c.l.b16 %v328
    %v582 = vunpack.c.h.b16 %v328
    %v583 = vunpack.c.l.b16 %v329
    %v584 = vunpack.c.l.b16 %v330
    %v585 = vunpack.c.h.b16 %v330
    %v586 = vunpack.c.l.b16 %v331
    %v587 = vunpack.c.l.b16 %v332
    %v588 = vunpack.c.h.b16 %v332
    %v589 = vunpack.c.l.b16 %v333
    %v590 = vunpack.c.l.b16 %v334
    %v591 = vunpack.c.h.b16 %v334
    %v592 = vunpack.c.l.b16 %v335
    %v593 = vpack.c.b16 %v452, %v449
    %v594 = vpack.c.b16 %v453, %v450
    %v595 = vpack.c.b16 %v454, %v451
    %v596 = vpack.c.b16 %v458, %v455
    %v597 = vpack.c.b16 %v459, %v456
    %v598 = vpack.c.b16 %v460, %v457
    %v599 = vpack.c.b16 %v464, %v461
    %v600 = vpack.c.b16 %v465, %v462
    %v601 = vpack.c.b16 %v466, %v463
    %v602 = vpack.c.b16 %v470, %v467
    %v603 = vpack.c.b16 %v471, %v468
    %v604 = vpack.c.b16 %v472, %v469
    %v605 = vpack.c.b16 %v476, %v473
    %v606 = vpack.c.b16 %v477, %v474
    %v607 = vpack.c.b16 %v478, %v475
    %v608 = vpack.c.b16 %v482, %v479
    %v609 = vpack.c.b16 %v483, %v480
    %v610 = vpack.c.b16 %v484, %v481
    %v611 = vpack.c.b16 %v488, %v485
    %v612 = vpack.c.b16 %v489, %v486
    %v613 = vpack.c.b16 %v490, %v487
    %v614 = vpack.c.b16 %v494, %v491
    %v615 = vpack.c.b16 %v495, %v492
    %v616 = vpack.c.b16 %v496, %v493
    %v617 = vpack.c.b16 %v500, %v497
    %v618 = vpack.c.b16 %v501, %v498
    %v619 = vpack.c.b16 %v502, %v499
    %v620 = vpack.c.b16 %v506, %v503
    %v621 = vpack.c.b16 %v507, %v504
    %v622 = vpack.c.b16 %v508, %v505
    %v623 = vpack.c.b16 %v512, %v509
    %v624 = vpack.c.b16 %v513, %v510
    %v625 = vpack.c.b16 %v514, %v511
    %v626 = vpack.c.b16 %v518, %v515
    %v627 = vpack.c.b16 %v519, %v516
    %v628 = vpack.c.b16 %v520, %v517
    %v629 = vpack.c.b16 %v524, %v521
    %v630 = vpack.c.b16 %v525, %v522
    %v631 = vpack.c.b16 %v526, %v523
    %v632 = vpack.c.b16 %v530, %v527
    %v633 = vpack.c.b16 %v531, %v528
    %v634 = vpack.c.b16 %v532, %v529
    %v635 = vpack.c.b16 %v536, %v533
    %v636 = vpack.c.b16 %v537, %v534
    %v637 = vpack.c.b16 %v538, %v535
    %v638 = vpack.c.b16 %v542, %v539
    %v639 = vpack.c.b16 %v543, %v540
    %v640 = vpack.c.b16 %v544, %v541
    %v641 = vpack.c.b16 %v548, %v545
    %v642 = vpack.c.b16 %v549, %v546
    %v643 = vpack.c.b16 %v550, %v547
    %v644 = vpack.c.b16 %v554, %v551
    %v645 = vpack.c.b16 %v555, %v552
    %v646 = vpack.c.b16 %v556, %v553
    %v647 = vpack.c.b16 %v560, %v557
    %v648 = vpack.c.b16 %v561, %v558
    %v649 = vpack.c.b16 %v562, %v559
    %v650 = vpack.c.b16 %v566, %v563
    %v651 = vpack.c.b16 %v567, %v564
    %v652 = vpack.c.b16 %v568, %v565
    %v653 = vpack.c.b16 %v572, %v569
    %v654 = vpack.c.b16 %v573, %v570
    %v655 = vpack.c.b16 %v574, %v571
    %v656 = vpack.c.b16 %v578, %v575
    %v657 = vpack.c.b16 %v579, %v576
    %v658 = vpack.c.b16 %v580, %v577
    %v659 = vpack.c.b16 %v584, %v581
    %v660 = vpack.c.b16 %v585, %v582
    %v661 = vpack.c.b16 %v586, %v583
    %v662 = vpack.c.b16 %v590, %v587
    %v663 = vpack.c.b16 %v591, %v588
    %v664 = vpack.c.b16 %v592, %v589
    %737 = vmatprep.subr.bf16.mxu0 %v615
    %738 = vmatpush1.bf16.msra.mxu0 %v614
    %739 = vmatprep.subr.bf16.mxu0 %v612
    %740 = vmatpush1.bf16.msra.mxu0 %v611
    %741 = vmatprep.subr.bf16.mxu0 %v609
    %742 = vmatpush1.bf16.msra.mxu0 %v608
    %743 = vmatprep.subr.bf16.mxu0 %v606
    %744 = vmatpush1.bf16.msra.mxu0 %v605
    %745 = vmatprep.subr.bf16.mxu0 %v603
    %746 = vmatpush1.bf16.msra.mxu0 %v602
    %747 = vmatprep.subr.bf16.mxu0 %v600
    %748 = vmatpush1.bf16.msra.mxu0 %v599
    %749 = vmatprep.subr.bf16.mxu0 %v597
    %750 = vmatpush1.bf16.msra.mxu0 %v596
    %751 = vmatprep.subr.bf16.mxu0 %v594
    %752 = vmatpush1.bf16.msra.mxu0 %v593
    %753 = vmatprep.subr.bf16.mxu0 %v639
    %754 = vmatpush2.bf16.msra.mxu0 %v638
    %755 = vmatprep.subr.bf16.mxu0 %v636
    %756 = vmatpush2.bf16.msra.mxu0 %v635
    %757 = vmatprep.subr.bf16.mxu0 %v633
    %758 = vmatpush2.bf16.msra.mxu0 %v632
    %759 = vmatprep.subr.bf16.mxu0 %v630
    %760 = vmatpush2.bf16.msra.mxu0 %v629
    %761 = vmatprep.subr.bf16.mxu0 %v627
    %762 = vmatpush2.bf16.msra.mxu0 %v626
    %763 = vmatprep.subr.bf16.mxu0 %v624
    %764 = vmatpush2.bf16.msra.mxu0 %v623
    %765 = vmatprep.subr.bf16.mxu0 %v621
    %766 = vmatpush2.bf16.msra.mxu0 %v620
    %767 = vmatprep.subr.bf16.mxu0 %v618
    %768 = vmatpush2.bf16.msra.mxu0 %v617
    %769 = vmatprep.mubr.bf16.mxu0 %v238
    %770 = vmatmul.mubr.bf16.gmra.mxu0 %v237
    %v771 = vpop.f32.mrf.mxu0
    %v772 = vadd.f32 %v341, %v771
    %v773 = vpop.f32.mrf.mxu0
    %v774 = vadd.f32 %v345, %v773
    %v775 = vpop.f32.mrf.mxu0
    %v776 = vadd.f32 %v341, %v775
    %v777 = vpop.f32.mrf.mxu0
    %v778 = vadd.f32 %v345, %v777
    %779 = vdwg.mxu0
    %780 = vmatprep.subr.bf16.mxu0 %v663
    %781 = vmatpush1.bf16.msra.mxu0 %v662
    %782 = vmatprep.subr.bf16.mxu0 %v660
    %783 = vmatpush1.bf16.msra.mxu0 %v659
    %784 = vmatprep.subr.bf16.mxu0 %v657
    %785 = vmatpush1.bf16.msra.mxu0 %v656
    %786 = vmatprep.subr.bf16.mxu0 %v654
    %787 = vmatpush1.bf16.msra.mxu0 %v653
    %788 = vmatprep.subr.bf16.mxu0 %v651
    %789 = vmatpush1.bf16.msra.mxu0 %v650
    %790 = vmatprep.subr.bf16.mxu0 %v648
    %791 = vmatpush1.bf16.msra.mxu0 %v647
    %792 = vmatprep.subr.bf16.mxu0 %v645
    %793 = vmatpush1.bf16.msra.mxu0 %v644
    %794 = vmatprep.subr.bf16.mxu0 %v642
    %795 = vmatpush1.bf16.msra.mxu0 %v641
    %796 = vmatprep.subr.bf16.mxu0 0
    %797 = vmatpush2.bf16.msra.mxu0 0
    %798 = vmatprep.subr.bf16.mxu0 0
    %799 = vmatpush2.bf16.msra.mxu0 0
    %800 = vmatprep.subr.bf16.mxu0 0
    %801 = vmatpush2.bf16.msra.mxu0 0
    %802 = vmatprep.subr.bf16.mxu0 0
    %803 = vmatpush2.bf16.msra.mxu0 0
    %804 = vmatprep.subr.bf16.mxu0 0
    %805 = vmatpush2.bf16.msra.mxu0 0
    %806 = vmatprep.subr.bf16.mxu0 0
    %807 = vmatpush2.bf16.msra.mxu0 0
    %808 = vmatprep.subr.bf16.mxu0 0
    %809 = vmatpush2.bf16.msra.mxu0 0
    %810 = vmatprep.subr.bf16.mxu0 0
    %811 = vmatpush2.bf16.msra.mxu0 0
    %812 = vmatprep.mubr.bf16.mxu0 0
    %813 = vmatmul.mubr.bf16.gmra.mxu0 %v239
    %v814 = vpop.f32.mrf.mxu0
    %v815 = vadd.f32 %v772, %v814
    %v816 = vpop.f32.mrf.mxu0
    %v817 = vadd.f32 %v774, %v816
    %v818 = vpop.f32.mrf.mxu0
    %v819 = vadd.f32 %v776, %v818
    %v820 = vpop.f32.mrf.mxu0
    %v821 = vadd.f32 %v778, %v820
    %822 = vdwg.mxu0
    %823 = vmatprep.subr.bf16.mxu0 0
    %824 = vmatpush1.bf16.msra.mxu0 %v616
    %825 = vmatprep.subr.bf16.mxu0 0
    %826 = vmatpush1.bf16.msra.mxu0 %v613
    %827 = vmatprep.subr.bf16.mxu0 0
    %828 = vmatpush1.bf16.msra.mxu0 %v610
    %829 = vmatprep.subr.bf16.mxu0 0
    %830 = vmatpush1.bf16.msra.mxu0 %v607
    %831 = vmatprep.subr.bf16.mxu0 0
    %832 = vmatpush1.bf16.msra.mxu0 %v604
    %833 = vmatprep.subr.bf16.mxu0 0
    %834 = vmatpush1.bf16.msra.mxu0 %v601
    %835 = vmatprep.subr.bf16.mxu0 0
    %836 = vmatpush1.bf16.msra.mxu0 %v598
    %837 = vmatprep.subr.bf16.mxu0 0
    %838 = vmatpush1.bf16.msra.mxu0 %v595
    %839 = vmatprep.subr.bf16.mxu0 0
    %840 = vmatpush2.bf16.msra.mxu0 %v640
    %841 = vmatprep.subr.bf16.mxu0 0
    %842 = vmatpush2.bf16.msra.mxu0 %v637
    %843 = vmatprep.subr.bf16.mxu0 0
    %844 = vmatpush2.bf16.msra.mxu0 %v634
    %845 = vmatprep.subr.bf16.mxu0 0
    %846 = vmatpush2.bf16.msra.mxu0 %v631
    %847 = vmatprep.subr.bf16.mxu0 0
    %848 = vmatpush2.bf16.msra.mxu0 %v628
    %849 = vmatprep.subr.bf16.mxu0 0
    %850 = vmatpush2.bf16.msra.mxu0 %v625
    %851 = vmatprep.subr.bf16.mxu0 0
    %852 = vmatpush2.bf16.msra.mxu0 %v622
    %853 = vmatprep.subr.bf16.mxu0 0
    %854 = vmatpush2.bf16.msra.mxu0 %v619
    %855 = vmatprep.mubr.bf16.mxu0 %v238
    %856 = vmatmul.mubr.bf16.gmra.mxu0 %v237
    %v857 = vpop.f32.mrf.mxu0
    %v858 = vadd.f32 %v349, %v857
    %v859 = vpop.f32.mrf.mxu0
    %v860 = vpop.f32.mrf.mxu0
    %v861 = vadd.f32 %v349, %v860
    %v862 = vpop.f32.mrf.mxu0
    %863 = vdwg.mxu0
    %864 = vmatprep.subr.bf16.mxu0 0
    %865 = vmatpush1.bf16.msra.mxu0 %v664
    %866 = vmatprep.subr.bf16.mxu0 0
    %867 = vmatpush1.bf16.msra.mxu0 %v661
    %868 = vmatprep.subr.bf16.mxu0 0
    %869 = vmatpush1.bf16.msra.mxu0 %v658
    %870 = vmatprep.subr.bf16.mxu0 0
    %871 = vmatpush1.bf16.msra.mxu0 %v655
    %872 = vmatprep.subr.bf16.mxu0 0
    %873 = vmatpush1.bf16.msra.mxu0 %v652
    %874 = vmatprep.subr.bf16.mxu0 0
    %875 = vmatpush1.bf16.msra.mxu0 %v649
    %876 = vmatprep.subr.bf16.mxu0 0
    %877 = vmatpush1.bf16.msra.mxu0 %v646
    %878 = vmatprep.subr.bf16.mxu0 0
    %879 = vmatpush1.bf16.msra.mxu0 %v643
    %880 = vmatprep.subr.bf16.mxu0 0
    %881 = vmatpush2.bf16.msra.mxu0 0
    %882 = vmatprep.subr.bf16.mxu0 0
    %883 = vmatpush2.bf16.msra.mxu0 0
    %884 = vmatprep.subr.bf16.mxu0 0
    %885 = vmatpush2.bf16.msra.mxu0 0
    %886 = vmatprep.subr.bf16.mxu0 0
    %887 = vmatpush2.bf16.msra.mxu0 0
    %888 = vmatprep.subr.bf16.mxu0 0
    %889 = vmatpush2.bf16.msra.mxu0 0
    %890 = vmatprep.subr.bf16.mxu0 0
    %891 = vmatpush2.bf16.msra.mxu0 0
    %892 = vmatprep.subr.bf16.mxu0 0
    %893 = vmatpush2.bf16.msra.mxu0 0
    %894 = vmatprep.subr.bf16.mxu0 0
    %895 = vmatpush2.bf16.msra.mxu0 0
    %896 = vmatprep.mubr.bf16.mxu0 0
    %897 = vmatmul.mubr.bf16.gmra.mxu0 %v239
    %v898 = vpop.f32.mrf.mxu0
    %v899 = vadd.f32 %v858, %v898
    %v900 = vpop.f32.mrf.mxu0
    %v901 = vpop.f32.mrf.mxu0
    %v902 = vadd.f32 %v861, %v901
    %v903 = vpop.f32.mrf.mxu0
    %904 = vdwg.mxu0
    %v905 = vmax.f32 %v815, 0.0
    %v906 = vmax.f32 %v817, 0.0
    %v907 = vmax.f32 %v899, 0.0
    %v908 = vmax.f32 %v819, 0.0
    %v909 = vmax.f32 %v821, 0.0
    %v910 = vmax.f32 %v902, 0.0
    %v911 = vpack.c.bf16 %v908, %v905
    %v912 = vpack.c.bf16 %v909, %v906
    %v913 = vpack.c.bf16 %v910, %v907
    %v914 = vld [vmem:[#allocation8] sm:$0xf]
    %v915 = vld [vmem:[#allocation8 + $0x4] sm:$0xf]
    %v916 = vld [vmem:[#allocation8 + $0x8] sm:$0xf]
    %v917 = vld [vmem:[#allocation8 + $0xc] sm:$0xf]
    %v918 = vld [vmem:[#allocation8 + $0x10] sm:$0xf]
    %v919 = vld [vmem:[#allocation8 + $0x14] sm:$0xf]
    %v920 = vld [vmem:[#allocation8 + $0x18] sm:$0xf]
    %v921 = vld [vmem:[#allocation8 + $0x1c] sm:$0xf]
    %v922 = vld [vmem:[#allocation8 + $0x20] sm:$0xf]
    %v923 = vld [vmem:[#allocation8 + $0x24] sm:$0xf]
    %v924 = vld [vmem:[#allocation8 + $0x28] sm:$0xf]
    %v925 = vld [vmem:[#allocation8 + $0x2c] sm:$0xf]
    %v926 = vld [vmem:[#allocation8 + $0x30] sm:$0xf]
    %v927 = vld [vmem:[#allocation8 + $0x34] sm:$0xf]
    %v928 = vld [vmem:[#allocation8 + $0x38] sm:$0xf]
    %v929 = vld [vmem:[#allocation8 + $0x3c] sm:$0xf]
    %v930 = vld [vmem:[#allocation8 + $0x40] sm:$0xf]
    %v931 = vld [vmem:[#allocation8 + $0x44] sm:$0xf]
    %v932 = vld [vmem:[#allocation8 + $0x48] sm:$0xf]
    %v933 = vld [vmem:[#allocation8 + $0x4c] sm:$0xf]
    %v934 = vld [vmem:[#allocation8 + $0x50] sm:$0xf]
    %v935 = vld [vmem:[#allocation8 + $0x54] sm:$0xf]
    %v936 = vld [vmem:[#allocation8 + $0x58] sm:$0xf]
    %v937 = vld [vmem:[#allocation8 + $0x5c] sm:$0xf]
    %v938 = vld [vmem:[#allocation8 + $0x60] sm:$0xf]
    %v939 = vld [vmem:[#allocation8 + $0x64] sm:$0xf]
    %v940 = vld [vmem:[#allocation8 + $0x68] sm:$0xf]
    %v941 = vld [vmem:[#allocation8 + $0x6c] sm:$0xf]
    %v942 = vld [vmem:[#allocation8 + $0x70] sm:$0xf]
    %v943 = vld [vmem:[#allocation8 + $0x74] sm:$0xf]
    %v944 = vld [vmem:[#allocation8 + $0x78] sm:$0xf]
    %v945 = vld [vmem:[#allocation8 + $0x7c] sm:$0xf]
    %v946 = vld [vmem:[#allocation8 + $0x80] sm:$0xf]
    %v947 = vld [vmem:[#allocation8 + $0x84] sm:$0xf]
    %v948 = vld [vmem:[#allocation8 + $0x88] sm:$0xf]
    %v949 = vld [vmem:[#allocation8 + $0x8c] sm:$0xf]
    %v950 = vld [vmem:[#allocation8 + $0x90] sm:$0xf]
    %v951 = vld [vmem:[#allocation8 + $0x94] sm:$0xf]
    %v952 = vld [vmem:[#allocation8 + $0x98] sm:$0xf]
    %v953 = vld [vmem:[#allocation8 + $0x9c] sm:$0xf]
    %v954 = vld [vmem:[#allocation8 + $0xa0] sm:$0xf]
    %v955 = vld [vmem:[#allocation8 + $0xa4] sm:$0xf]
    %v956 = vld [vmem:[#allocation8 + $0xa8] sm:$0xf]
    %v957 = vld [vmem:[#allocation8 + $0xac] sm:$0xf]
    %v958 = vld [vmem:[#allocation8 + $0xb0] sm:$0xf]
    %v959 = vld [vmem:[#allocation8 + $0xb4] sm:$0xf]
    %v960 = vld [vmem:[#allocation8 + $0xb8] sm:$0xf]
    %v961 = vld [vmem:[#allocation8 + $0xbc] sm:$0xf]
    %v962 = vld [vmem:[%s6] sm:$0x1]
    %v964 = vlaneseq
    %v965 = vshrl.u32 %v964, 7
    %v966 = vsub.s32 0, %v965
    %v967 = vrot.slane %v962, %v966
    %v1017 = vunpack.c.l.b16 %v914
    %v1018 = vunpack.c.l.b16 %v915
    %v1019 = vunpack.c.l.b16 %v916
    %v1020 = vunpack.c.l.b16 %v917
    %v1021 = vunpack.c.l.b16 %v918
    %v1022 = vunpack.c.l.b16 %v919
    %v1023 = vunpack.c.l.b16 %v920
    %v1024 = vunpack.c.l.b16 %v921
    %v1025 = vunpack.c.l.b16 %v922
    %v1026 = vunpack.c.l.b16 %v923
    %v1027 = vunpack.c.l.b16 %v924
    %v1028 = vunpack.c.l.b16 %v925
    %v1029 = vunpack.c.l.b16 %v926
    %v1030 = vunpack.c.l.b16 %v927
    %v1031 = vunpack.c.l.b16 %v928
    %v1032 = vunpack.c.l.b16 %v929
    %v1033 = vunpack.c.l.b16 %v930
    %v1034 = vunpack.c.l.b16 %v931
    %v1035 = vunpack.c.l.b16 %v932
    %v1036 = vunpack.c.l.b16 %v933
    %v1037 = vunpack.c.l.b16 %v934
    %v1038 = vunpack.c.l.b16 %v935
    %v1039 = vunpack.c.l.b16 %v936
    %v1040 = vunpack.c.l.b16 %v937
    %v1041 = vunpack.c.l.b16 %v938
    %v1042 = vunpack.c.l.b16 %v939
    %v1043 = vunpack.c.l.b16 %v940
    %v1044 = vunpack.c.l.b16 %v941
    %v1045 = vunpack.c.l.b16 %v942
    %v1046 = vunpack.c.l.b16 %v943
    %v1047 = vunpack.c.l.b16 %v944
    %v1048 = vunpack.c.l.b16 %v945
    %v1049 = vunpack.c.l.b16 %v946
    %v1050 = vunpack.c.l.b16 %v947
    %v1051 = vunpack.c.l.b16 %v948
    %v1052 = vunpack.c.l.b16 %v949
    %v1053 = vunpack.c.l.b16 %v950
    %v1054 = vunpack.c.l.b16 %v951
    %v1055 = vunpack.c.l.b16 %v952
    %v1056 = vunpack.c.l.b16 %v953
    %v1057 = vunpack.c.l.b16 %v954
    %v1058 = vunpack.c.l.b16 %v955
    %v1059 = vunpack.c.l.b16 %v956
    %v1060 = vunpack.c.l.b16 %v957
    %v1061 = vunpack.c.l.b16 %v958
    %v1062 = vunpack.c.l.b16 %v959
    %v1063 = vunpack.c.l.b16 %v960
    %v1064 = vunpack.c.l.b16 %v961
    %v1065 = vpack.c.b16 %v1018, %v1017
    %v1066 = vpack.c.b16 %v1020, %v1019
    %v1067 = vpack.c.b16 %v1022, %v1021
    %v1068 = vpack.c.b16 %v1024, %v1023
    %v1069 = vpack.c.b16 %v1026, %v1025
    %v1070 = vpack.c.b16 %v1028, %v1027
    %v1071 = vpack.c.b16 %v1030, %v1029
    %v1072 = vpack.c.b16 %v1032, %v1031
    %v1073 = vpack.c.b16 %v1034, %v1033
    %v1074 = vpack.c.b16 %v1036, %v1035
    %v1075 = vpack.c.b16 %v1038, %v1037
    %v1076 = vpack.c.b16 %v1040, %v1039
    %v1077 = vpack.c.b16 %v1042, %v1041
    %v1078 = vpack.c.b16 %v1044, %v1043
    %v1079 = vpack.c.b16 %v1046, %v1045
    %v1080 = vpack.c.b16 %v1048, %v1047
    %v1081 = vpack.c.b16 %v1050, %v1049
    %v1082 = vpack.c.b16 %v1052, %v1051
    %v1083 = vpack.c.b16 %v1054, %v1053
    %v1084 = vpack.c.b16 %v1056, %v1055
    %v1085 = vpack.c.b16 %v1058, %v1057
    %v1086 = vpack.c.b16 %v1060, %v1059
    %v1087 = vpack.c.b16 %v1062, %v1061
    %v1088 = vpack.c.b16 %v1064, %v1063
    %1113 = vmatprep.subr.bf16.mxu0 0
    %1114 = vmatpush1.bf16.msra.mxu0 %v1072
    %1115 = vmatprep.subr.bf16.mxu0 0
    %1116 = vmatpush1.bf16.msra.mxu0 %v1071
    %1117 = vmatprep.subr.bf16.mxu0 0
    %1118 = vmatpush1.bf16.msra.mxu0 %v1070
    %1119 = vmatprep.subr.bf16.mxu0 0
    %1120 = vmatpush1.bf16.msra.mxu0 %v1069
    %1121 = vmatprep.subr.bf16.mxu0 0
    %1122 = vmatpush1.bf16.msra.mxu0 %v1068
    %1123 = vmatprep.subr.bf16.mxu0 0
    %1124 = vmatpush1.bf16.msra.mxu0 %v1067
    %1125 = vmatprep.subr.bf16.mxu0 0
    %1126 = vmatpush1.bf16.msra.mxu0 %v1066
    %1127 = vmatprep.subr.bf16.mxu0 0
    %1128 = vmatpush1.bf16.msra.mxu0 %v1065
    %1129 = vmatprep.subr.bf16.mxu0 0
    %1130 = vmatpush2.bf16.msra.mxu0 %v1080
    %1131 = vmatprep.subr.bf16.mxu0 0
    %1132 = vmatpush2.bf16.msra.mxu0 %v1079
    %1133 = vmatprep.subr.bf16.mxu0 0
    %1134 = vmatpush2.bf16.msra.mxu0 %v1078
    %1135 = vmatprep.subr.bf16.mxu0 0
    %1136 = vmatpush2.bf16.msra.mxu0 %v1077
    %1137 = vmatprep.subr.bf16.mxu0 0
    %1138 = vmatpush2.bf16.msra.mxu0 %v1076
    %1139 = vmatprep.subr.bf16.mxu0 0
    %1140 = vmatpush2.bf16.msra.mxu0 %v1075
    %1141 = vmatprep.subr.bf16.mxu0 0
    %1142 = vmatpush2.bf16.msra.mxu0 %v1074
    %1143 = vmatprep.subr.bf16.mxu0 0
    %1144 = vmatpush2.bf16.msra.mxu0 %v1073
    %1145 = vmatprep.mubr.bf16.mxu0 %v912
    %1146 = vmatmul.mubr.bf16.gmra.mxu0 %v911
    %v1147 = vpop.f32.mrf.mxu0
    %v1148 = vadd.f32 %v967, %v1147
    %v1149 = vpop.f32.mrf.mxu0
    %v1150 = vpop.f32.mrf.mxu0
    %v1151 = vadd.f32 %v967, %v1150
    %v1152 = vpop.f32.mrf.mxu0
    %1153 = vdwg.mxu0
    %1154 = vmatprep.subr.bf16.mxu0 0
    %1155 = vmatpush1.bf16.msra.mxu0 %v1088
    %1156 = vmatprep.subr.bf16.mxu0 0
    %1157 = vmatpush1.bf16.msra.mxu0 %v1087
    %1158 = vmatprep.subr.bf16.mxu0 0
    %1159 = vmatpush1.bf16.msra.mxu0 %v1086
    %1160 = vmatprep.subr.bf16.mxu0 0
    %1161 = vmatpush1.bf16.msra.mxu0 %v1085
    %1162 = vmatprep.subr.bf16.mxu0 0
    %1163 = vmatpush1.bf16.msra.mxu0 %v1084
    %1164 = vmatprep.subr.bf16.mxu0 0
    %1165 = vmatpush1.bf16.msra.mxu0 %v1083
    %1166 = vmatprep.subr.bf16.mxu0 0
    %1167 = vmatpush1.bf16.msra.mxu0 %v1082
    %1168 = vmatprep.subr.bf16.mxu0 0
    %1169 = vmatpush1.bf16.msra.mxu0 %v1081
    %1170 = vmatprep.subr.bf16.mxu0 0
    %1171 = vmatpush2.bf16.msra.mxu0 0
    %1172 = vmatprep.subr.bf16.mxu0 0
    %1173 = vmatpush2.bf16.msra.mxu0 0
    %1174 = vmatprep.subr.bf16.mxu0 0
    %1175 = vmatpush2.bf16.msra.mxu0 0
    %1176 = vmatprep.subr.bf16.mxu0 0
    %1177 = vmatpush2.bf16.msra.mxu0 0
    %1178 = vmatprep.subr.bf16.mxu0 0
    %1179 = vmatpush2.bf16.msra.mxu0 0
    %1180 = vmatprep.subr.bf16.mxu0 0
    %1181 = vmatpush2.bf16.msra.mxu0 0
    %1182 = vmatprep.subr.bf16.mxu0 0
    %1183 = vmatpush2.bf16.msra.mxu0 0
    %1184 = vmatprep.subr.bf16.mxu0 0
    %1185 = vmatpush2.bf16.msra.mxu0 0
    %1186 = vmatprep.mubr.bf16.mxu0 0
    %1187 = vmatmul.mubr.bf16.gmra.mxu0 %v913
    %v1188 = vpop.f32.mrf.mxu0
    %v1189 = vadd.f32 %v1148, %v1188
    %v1190 = vpop.f32.mrf.mxu0
    %v1191 = vpop.f32.mrf.mxu0
    %v1192 = vadd.f32 %v1151, %v1191
    %v1193 = vpop.f32.mrf.mxu0
    %1194 = vdwg.mxu0
    %v1195 = vpack.c.bf16 %v1192, %v1189
    %v1197 = vunpack.c.l.b16 %v1195
    %v1198 = vunpack.c.h.b16 %v1195
    %v1199 = vpack.c.b16 %v1197, %v1197
    %v1200 = vpack.c.b16 %v1198, %v1198
    %1203 = vst [vmem:[#allocation10] sm:$0xf] %v1199
    %1204 = vst [vmem:[#allocation10 + $0x4] sm:$0xf] %v1200
    // Predicated region
    $region46: #{tpu_custom_call.1} parent=1 // pred_check
      _
    $region47: #{tpu_custom_call.1} parent=1 // pred_check_branch
      %1206 = sbr.rel (0) target = $region49
    $region48: #{tpu_custom_call.1} parent=1 // pred_region
      %s1208 = ssub.s32 128, 128
      %1209 = vsyncadd [#allocation4], %s1208
      %s1210 = sshll.u32 [#allocation10], 4
      %s1211 = int_to_ptr.vmem [resolvable:$true] %s1210
      %1216 = dma.vmem_to_hbm [thread:$0]  %s1211, 128, %s7, [#allocation4], 64, 64, 4
    $region49: #{tpu_custom_call.1} parent=1 // pred_fallthru
      _
    // Predicated region
    $region50: #{tpu_custom_call.1} parent=1 // pred_check
      _
    $region51: #{tpu_custom_call.1} parent=1 // pred_check_branch
      %1218 = sbr.rel (0) target = $region53
    $region52: #{tpu_custom_call.1} parent=1 // pred_region
      %1219 = dma.done [#allocation4], 128
    $region53: #{tpu_custom_call.1} parent=1 // pred_fallthru
      _
    %1220 = vsyncpa [#allocation3], 1
    %1221 = vsyncpa [#allocation6], 1
    %1222 = vsyncpa [#allocation9], 1
    %1223 = vsyncpa [#allocation4], 1

</llo_original>
